<compile_context>
chip_gen: v7x
topology: tpu7x:2x2x1
jax: 0.10.0
libtpu: 0.0.40
codegen_flags: <defaults>
</compile_context>

<pallas_src>
import functools

import numpy as np

import jax
import jax.numpy as jnp
from jax.experimental import pallas as pl
from jax.experimental.pallas import tpu as pltpu


def hp2_kernel(x_ref, o_ref, *, height, width):
    """One batch-block per grid step.

    x_ref : (bn, 3*H*W) float32 in VMEM (flattened NCHW input, channels folded into lanes)
    o_ref : (bn, 3*H*W) float32 in VMEM
    """
    hw = height * width

    # Gray conversion (VPU). PyTorch indexing: 0.299*ch2 + 0.587*ch1 + 0.114*ch0.
    gray = (0.299 * x_ref[:, 2 * hw:3 * hw]
            + 0.587 * x_ref[:, hw:2 * hw]
            + 0.114 * x_ref[:, 0:hw])                                  # (bn, hw)

    # Zero-padding boundary masks, built in-kernel (no captured constants):
    #   the j-1 tap wraps at the first column of each row; the i-1 tap wraps on the first row.
    col = jax.lax.broadcasted_iota(jnp.int32, (1, hw), 1)
    keep_left = (col % width) != 0          # j == 0  -> drop gray(i, j-1)
    keep_up = col >= width                  # i == 0  -> drop gray(i-1, j)

    # Flattened-plane stencil: rolls run on the XLU slot, masks/selects are plain VPU ops.
    left = jnp.where(keep_left, pltpu.roll(gray, 1, 1), 0.0)           # gray(i, j-1)
    up = jnp.where(keep_up, pltpu.roll(gray, width, 1), 0.0)           # gray(i-1, j)

    out = (gray - 0.5 * left - 0.5 * up).astype(o_ref.dtype)           # (bn, hw)

    # All 3 depthwise output channels are identical -> store the same plane three times
    # into dense lane slices (no (bn, 3, hw) broadcast materialization, no masked stores).
    o_ref[:, 0:hw] = out
    o_ref[:, hw:2 * hw] = out
    o_ref[:, 2 * hw:3 * hw] = out


def _is_v7x():
    try:
        kind = jax.devices()[0].device_kind.lower()
        return "v7" in kind
    except Exception:
        return False


def _choose_bn(n, cap, two_cores):
    """Largest divisor of n that fits the byte cap; on 2-TC chips prefer an even step count."""
    cap = max(1, cap)
    divs = [d for d in range(1, n + 1) if n % d == 0 and d <= cap] or [1]

    def key(d):
        steps = n // d
        parity = 1 if (not two_cores or (steps >= 2 and steps % 2 == 0)) else 0
        dense = 1 if (d == n or d % 8 == 0) else 0   # dense sublanes
        return (parity, dense, d)

    return max(divs, key=key)


def high_pass_ensemble(x, *, target_block_bytes=4 << 20):
    """x: (N, 3, H, W) float32, NCHW. Returns (N, 3, H, W) float32 (HP-2 forward)."""
    N, C, H, W = x.shape
    assert C == 3, "highPassEnsemble expects 3 input channels"
    HW = H * W
    CHW = C * HW
    itemsize = np.dtype(x.dtype).itemsize

    # Contiguous (free) reshape for NCHW: fold channels + plane into the lane axis.
    xf = x.reshape(N, CHW)

    bytes_per_image = CHW * itemsize
    cap = max(1, target_block_bytes // max(bytes_per_image, 1))
    bn = _choose_bn(N, cap, _is_v7x())
    grid = (N // bn,)

    # Explicit scoped-VMEM budget: in+out buffers, double-buffered, plus headroom.
    block_bytes = bn * bytes_per_image
    vmem_limit = int(min(max(4 * block_bytes + (2 << 20), 16 << 20), 56 << 20))
    # TODO(synk): HD/4K f32 frames need a second grid axis over row-blocks with a 1-row halo
    # (especially on v7x's 64 MiB VMEM); not needed at these sizes.

    out_flat = pl.pallas_call(
        functools.partial(hp2_kernel, height=H, width=W),
        out_shape=jax.ShapeDtypeStruct((N, CHW), x.dtype),
        grid=grid,
        in_specs=[pl.BlockSpec((bn, CHW), lambda n: (n, 0))],
        out_specs=pl.BlockSpec((bn, CHW), lambda n: (n, 0)),
        compiler_params=pltpu.CompilerParams(
            dimension_semantics=("parallel",),
            vmem_limit_bytes=vmem_limit),
        cost_estimate=pl.CostEstimate(
            flops=9 * N * HW,
            transcendentals=0,
            bytes_accessed=2 * N * CHW * itemsize),
    )(xf)

    return out_flat.reshape(N, C, H, W)


if __name__ == "__main__":
    # TODO(synk): kernel_size=3 / kernel_size=5 branches of __init__ are not implemented
    # (the default kernel_size=2 branch is the one this kernel covers).
    key = jax.random.PRNGKey(0)
    N, C, H, W = 2, 3, 16, 16
    x = jax.random.normal(key, (N, C, H, W), dtype=jnp.float32)

    out = jax.block_until_ready(jax.jit(high_pass_ensemble)(x))
    assert out.shape == (N, 3, H, W) and out.dtype == jnp.float32

    # Independent pure-JAX reference (forward differences with zero padding).
    gray = 0.299 * x[:, 2] + 0.587 * x[:, 1] + 0.114 * x[:, 0]          # (N, H, W)
    left = jnp.pad(gray, ((0, 0), (0, 0), (1, 0)))[:, :, :W]            # gray[..., j-1], 0 at j=0
    up = jnp.pad(gray, ((0, 0), (1, 0), (0, 0)))[:, :H, :]              # gray[i-1, j], 0 at i=0
    ref_plane = gray - 0.5 * left - 0.5 * up
    ref = jnp.broadcast_to(ref_plane[:, None, :, :], (N, 3, H, W))

    assert jnp.allclose(out, ref, atol=1e-5, rtol=1e-5)
    print("KERNEL_OK")
</pallas_src>

<mosaic_0001>
module attributes {stable_mosaic.version = 11 : i64} {
  func.func @hp2_kernel(%arg0: i32, %arg1: memref<2x768xf32, #tpu.memory_space<vmem>>, %arg2: memref<2x768xf32, #tpu.memory_space<vmem>>) attributes {dimension_semantics = [#tpu.dimension_semantics<parallel>], iteration_bounds = array<i64: 1>, scalar_prefetch = 0 : i64, scratch_operands = 0 : i64, tpu.core_type = #tpu.core_type<tc>, window_params = [{transform_indices = @transform_0, window_bounds = array<i64: 2, 768>}, {transform_indices = @transform_1, window_bounds = array<i64: 2, 768>}]} {
    %c0 = arith.constant 0 : index
    %c512 = arith.constant 512 : index
    %0 = vector.load %arg1[%c0, %c512] : memref<2x768xf32, #tpu.memory_space<vmem>>, vector<2x256xf32>
    %cst = arith.constant 2.990000e-01 : f32
    %1 = vector.broadcast %cst : f32 to vector<2x256xf32>
    %2 = arith.mulf %1, %0 : vector<2x256xf32>
    %c0_0 = arith.constant 0 : index
    %c256 = arith.constant 256 : index
    %3 = vector.load %arg1[%c0_0, %c256] : memref<2x768xf32, #tpu.memory_space<vmem>>, vector<2x256xf32>
    %cst_1 = arith.constant 5.870000e-01 : f32
    %4 = vector.broadcast %cst_1 : f32 to vector<2x256xf32>
    %5 = arith.mulf %4, %3 : vector<2x256xf32>
    %6 = arith.addf %2, %5 : vector<2x256xf32>
    %c0_2 = arith.constant 0 : index
    %c0_3 = arith.constant 0 : index
    %7 = vector.load %arg1[%c0_2, %c0_3] : memref<2x768xf32, #tpu.memory_space<vmem>>, vector<2x256xf32>
    %cst_4 = arith.constant 1.140000e-01 : f32
    %8 = vector.broadcast %cst_4 : f32 to vector<2x256xf32>
    %9 = arith.mulf %8, %7 : vector<2x256xf32>
    %10 = arith.addf %6, %9 : vector<2x256xf32>
    %11 = tpu.iota {dimensions = array<i32: 1>} : vector<1x256xi32>
    %c16_i32 = arith.constant 16 : i32
    %c0_i32 = arith.constant 0 : i32
    %12 = arith.cmpi eq, %c16_i32, %c0_i32 : i32
    %c1_i32 = arith.constant 1 : i32
    %13 = arith.select %12, %c1_i32, %c16_i32 : i32
    %14 = vector.broadcast %13 : i32 to vector<1x256xi32>
    %15 = arith.remsi %11, %14 : vector<1x256xi32>
    %c0_i32_5 = arith.constant 0 : i32
    %16 = vector.broadcast %c0_i32_5 : i32 to vector<1x256xi32>
    %17 = arith.cmpi ne, %15, %16 : vector<1x256xi32>
    %c0_i32_6 = arith.constant 0 : i32
    %18 = vector.broadcast %c0_i32_6 : i32 to vector<1x256xi32>
    %19 = arith.cmpi slt, %15, %18 : vector<1x256xi32>
    %c0_i32_7 = arith.constant 0 : i32
    %20 = arith.cmpi slt, %13, %c0_i32_7 : i32
    %21 = vector.broadcast %20 : i1 to vector<1x256xi1>
    %22 = vector.broadcast %21 : vector<1x256xi1> to vector<1x256xi1>
    %23 = arith.xori %19, %22 : vector<1x256xi1>
    %24 = arith.andi %23, %17 : vector<1x256xi1>
    %25 = vector.broadcast %13 : i32 to vector<1x256xi32>
    %26 = arith.addi %15, %25 : vector<1x256xi32>
    %27 = arith.select %24, %26, %15 : vector<1x256xi1>, vector<1x256xi32>
    %c0_i32_8 = arith.constant 0 : i32
    %28 = vector.broadcast %c0_i32_8 : i32 to vector<1x256xi32>
    %29 = arith.cmpi ne, %27, %28 : vector<1x256xi32>
    %c16_i32_9 = arith.constant 16 : i32
    %30 = vector.broadcast %c16_i32_9 : i32 to vector<1x256xi32>
    %31 = arith.cmpi sge, %11, %30 : vector<1x256xi32>
    %c1_i32_10 = arith.constant 1 : i32
    %32 = tpu.dynamic_rotate %10 by %c1_i32_10 dim 1 : vector<2x256xf32>, i32 -> vector<2x256xf32>
    %cst_11 = arith.constant 0.000000e+00 : f32
    %33 = vector.shape_cast %29 : vector<1x256xi1> to vector<1x256xi1>
    %34 = vector.broadcast %33 : vector<1x256xi1> to vector<2x256xi1>
    %35 = vector.broadcast %cst_11 : f32 to vector<2x256xf32>
    %36 = arith.select %34, %32, %35 : vector<2x256xi1>, vector<2x256xf32>
    %c16_i32_12 = arith.constant 16 : i32
    %37 = tpu.dynamic_rotate %10 by %c16_i32_12 dim 1 : vector<2x256xf32>, i32 -> vector<2x256xf32>
    %cst_13 = arith.constant 0.000000e+00 : f32
    %38 = vector.shape_cast %31 : vector<1x256xi1> to vector<1x256xi1>
    %39 = vector.broadcast %38 : vector<1x256xi1> to vector<2x256xi1>
    %40 = vector.broadcast %cst_13 : f32 to vector<2x256xf32>
    %41 = arith.select %39, %37, %40 : vector<2x256xi1>, vector<2x256xf32>
    %cst_14 = arith.constant 5.000000e-01 : f32
    %42 = vector.broadcast %cst_14 : f32 to vector<2x256xf32>
    %43 = arith.mulf %42, %36 : vector<2x256xf32>
    %44 = arith.subf %10, %43 : vector<2x256xf32>
    %cst_15 = arith.constant 5.000000e-01 : f32
    %45 = vector.broadcast %cst_15 : f32 to vector<2x256xf32>
    %46 = arith.mulf %45, %41 : vector<2x256xf32>
    %47 = arith.subf %44, %46 : vector<2x256xf32>
    %c0_16 = arith.constant 0 : index
    %c0_17 = arith.constant 0 : index
    %48 = vector.load %arg2[%c0_16, %c0_17] : memref<2x768xf32, #tpu.memory_space<vmem>>, vector<2x256xf32>
    tpu.vector_store %arg2[%c0_16, %c0_17], %47 {strides = array<i32>} : memref<2x768xf32, #tpu.memory_space<vmem>>, vector<2x256xf32>,
    %c0_18 = arith.constant 0 : index
    %c256_19 = arith.constant 256 : index
    %49 = vector.load %arg2[%c0_18, %c256_19] : memref<2x768xf32, #tpu.memory_space<vmem>>, vector<2x256xf32>
    tpu.vector_store %arg2[%c0_18, %c256_19], %47 {strides = array<i32>} : memref<2x768xf32, #tpu.memory_space<vmem>>, vector<2x256xf32>,
    %c0_20 = arith.constant 0 : index
    %c512_21 = arith.constant 512 : index
    %50 = vector.load %arg2[%c0_20, %c512_21] : memref<2x768xf32, #tpu.memory_space<vmem>>, vector<2x256xf32>
    tpu.vector_store %arg2[%c0_20, %c512_21], %47 {strides = array<i32>} : memref<2x768xf32, #tpu.memory_space<vmem>>, vector<2x256xf32>,
    return
  }
  func.func @transform_0(%arg0: i32) -> (i32, i32) {
    %c0_i32 = arith.constant 0 : i32
    %c0_i32_0 = arith.constant 0 : i32
    return %arg0, %c0_i32 : i32, i32
  }
  func.func @transform_1(%arg0: i32) -> (i32, i32) {
    %c0_i32 = arith.constant 0 : i32
    %c0_i32_0 = arith.constant 0 : i32
    return %arg0, %c0_i32 : i32, i32
  }
}

</mosaic_0001>

<llo_original>
// kernel: high_pass_ensemble.1
$region0: #{high_pass_ensemble.1}
  #allocation0 [shape = 'u32[]', space=smem, size = 0x4, offset = 0x4, fixed_abs, tag = 'smem constant byte address 0x4 - core index']
  #allocation1 [shape = 'u32[144,128]{1,0:T(1,128)}', space=vmem, size = 0x12000, scoped, tag = 'internal scratch']
  %s0 = inlined_call_operand.vmem [shape: f32[2,768], index: 0, kind: input, shape index: {}]
  %s1 = inlined_call_operand.vmem [shape: f32[2,768], index: 1, kind: output, shape index: {}]
  %s2 = sld [smem:[#allocation0]]
  $region14: #{high_pass_ensemble.1} parent=0
    _
  %s4 = ssub.s32 1, %s2
  %s5 = scalar_select 0, %s4, %s2
  // Predicated region
  $region2: #{high_pass_ensemble.1} parent=0 // pred_check
    _
  $region3: #{high_pass_ensemble.1} parent=0 // pred_check_branch
    %7 = sbr.rel (0) target = $region5
  $region4: #{high_pass_ensemble.1} parent=0 // pred_region
    _
  $region5: #{high_pass_ensemble.1} parent=0 // pred_fallthru
    _
  %v8 = vld [vmem:[%s0 + $0x8] sm:$0xf]
  %v9 = vmul.f32 %v8, 0.299
  %v10 = vld [vmem:[%s0 + $0x4] sm:$0xf]
  %v11 = vmul.f32 %v10, 0.587
  %v12 = vadd.f32 %v9, %v11
  %v13 = vld [vmem:[%s0] sm:$0xf]
  %v14 = vmul.f32 %v13, 0.114
  %v15 = vadd.f32 %v12, %v14
  %v16 = vlaneseq
  %v17 = vand.u32 %v16, 127
  %v18 = vadd.s32 %v17, 128
  %vm19 = vcmp.lt.s32.totalorder %v17, 0
  %v20 = vsub.s32 0, %v17
  %v21 = vsel %vm19, %v20, %v17
  %v22 = vshrl.u32 %v21, 4
  %v23 = vand.u32 %v21, 15
  %v24 = vsub.s32 0, %v23
  %v25 = vsel %vm19, %v24, %v23
  %vm26 = vcmp.lt.s32.totalorder %v18, 0
  %v27 = vsub.s32 0, %v18
  %v28 = vsel %vm26, %v27, %v18
  %v29 = vshrl.u32 %v28, 4
  %v30 = vand.u32 %v28, 15
  %v31 = vsub.s32 0, %v30
  %v32 = vsel %vm26, %v31, %v30
  %vm33 = vcmp.ne.s32.totalorder %v25, 0
  %vm34 = vcmp.ne.s32.totalorder %v32, 0
  %vm35 = vcmp.lt.s32.totalorder %v25, 0
  %vm36 = vcmp.lt.s32.totalorder %v32, 0
  %vm37 = vmand %vm35, %vm33
  %vm38 = vmand %vm36, %vm34
  %v39 = vadd.s32 %v25, 16
  %v40 = vadd.s32 %v32, 16
  %v41 = vsel %vm37, %v39, %v25
  %v42 = vsel %vm38, %v40, %v32
  %vm43 = vcmp.ne.s32.totalorder %v41, 0
  %vm44 = vcmp.ne.s32.totalorder %v42, 0
  %vm45 = vcmp.ge.s32.totalorder %v17, 16
  %vm46 = vcmp.ge.s32.totalorder %v18, 16
  %v49 = vunpack.c.l.s4 1983009808
  %v50 = vunpack.c.0.s8 %v49
  %v51 = vlaneseq
  %v52 = vshrl.u32 %v51, 7
  %v53 = vsub.s32 %v50, %v52
  %v54 = vrot.slane %v15, %v53
  %v55 = vcombine.high %v54, %v54
  %58 = vrot.lane.b32.xlu0 %v54, 1
  %v59 = vpop.permute.xlu0 %58
  %60 = vrot.lane.b32.xlu0 %v55, 1
  %v61 = vpop.permute.xlu0 %60
  %vm62 = vcmp.lt.s32.totalorder %v17, 1
  %v63 = vsel %vm62, %v59, %v61
  %v64 = vsel %vm62, %v61, %v59
  %v65 = vsel %vm43, 1, 0
  %v66 = vsel %vm44, 1, 0
  %vm67 = vcmp.eq.s32.totalorder %v65, 1
  %vm68 = vcmp.eq.s32.totalorder %v66, 1
  %v69 = vsel %vm67, %v64, 0.0
  %v70 = vsel %vm68, %v63, 0.0
  %71 = vrot.lane.b32.xlu0 %v54, 16
  %v72 = vpop.permute.xlu0 %71
  %73 = vrot.lane.b32.xlu0 %v55, 16
  %v74 = vpop.permute.xlu0 %73
  %vm75 = vcmp.lt.s32.totalorder %v17, 16
  %v76 = vsel %vm75, %v72, %v74
  %v77 = vsel %vm75, %v74, %v72
  %v78 = vsel %vm45, 1, 0
  %v79 = vsel %vm46, 1, 0
  %vm80 = vcmp.eq.s32.totalorder %v78, 1
  %vm81 = vcmp.eq.s32.totalorder %v79, 1
  %v82 = vsel %vm80, %v77, 0.0
  %v83 = vsel %vm81, %v76, 0.0
  %v84 = vmul.f32 %v69, 0.5
  %v85 = vmul.f32 %v70, 0.5
  %v88 = vcombine.low %v84, %v85
  %v90 = vunpack.c.l.s4 1983009808
  %v91 = vunpack.c.0.s8 %v90
  %v92 = vlaneseq
  %v93 = vshrl.u32 %v92, 7
  %v94 = vsub.s32 %v91, %v93
  %v95 = vrot.slane %v88, %v94
  %v97 = vsub.f32 %v15, %v95
  %v98 = vmul.f32 %v82, 0.5
  %v99 = vmul.f32 %v83, 0.5
  %v102 = vcombine.low %v98, %v99
  %v104 = vunpack.c.l.s4 1983009808
  %v105 = vunpack.c.0.s8 %v104
  %v106 = vlaneseq
  %v107 = vshrl.u32 %v106, 7
  %v108 = vsub.s32 %v105, %v107
  %v109 = vrot.slane %v102, %v108
  %v111 = vsub.f32 %v97, %v109
  %112 = vst [vmem:[%s1] sm:$0xf] %v111
  %113 = vst [vmem:[%s1 + $0x4] sm:$0xf] %v111
  %114 = vst [vmem:[%s1 + $0x8] sm:$0xf] %v111
  // Predicated region
  $region6: #{high_pass_ensemble.1} parent=0 // pred_check
    _
  $region7: #{high_pass_ensemble.1} parent=0 // pred_check_branch
    %116 = sbr.rel (0) target = $region9
  $region8: #{high_pass_ensemble.1} parent=0 // pred_region
    _
  $region9: #{high_pass_ensemble.1} parent=0 // pred_fallthru
    _
  // Predicated region
  $region10: #{high_pass_ensemble.1} parent=0 // pred_check
    _
  $region11: #{high_pass_ensemble.1} parent=0 // pred_check_branch
    %118 = sbr.rel (0) target = $region13
  $region12: #{high_pass_ensemble.1} parent=0 // pred_region
    _
  $region13: #{high_pass_ensemble.1} parent=0 // pred_fallthru
    _

</llo_original>
